<compile_context>
chip_gen: v7x
topology: tpu7x:2x2x1
jax: 0.10.0
libtpu: 0.0.40
codegen_flags: <defaults>
</compile_context>

<pallas_src>
import jax
import jax.numpy as jnp
from jax.experimental import pallas as pl
from jax.experimental.pallas import tpu as pltpu

# ---- problem sizes (small, consistent with the module) ----
NUM_CLASSES = 100
VOCAB = NUM_CLASSES + 1          # embedding rows (includes CFG null class)
COND_SIZE = 128                  # cond_size (lane-aligned)
NUM_LABELS = 16                  # batch of labels

# Fast path is used while the (padded) table comfortably fits VMEM.
_SMALL_TABLE_BYTES = 4 * 1024 * 1024


def _round_up(x, m):
    return (x + m - 1) // m * m


# ----------------------- fast path: one-hot MXU gather -----------------------
def _onehot_embed_kernel(labels_ref, table_ref, out_ref):
    labels = labels_ref[...]                                   # [B, 1] int32
    v = table_ref.shape[0]
    ids = jax.lax.broadcasted_iota(jnp.int32, (labels.shape[0], v), 1)
    one_hot = (ids == labels).astype(table_ref.dtype)          # [B, V]
    # Exact row gather on the MXU (each one-hot row selects exactly one table row).
    out_ref[...] = jnp.dot(one_hot, table_ref[...],
                           preferred_element_type=jnp.float32
                           ).astype(out_ref.dtype)


def _label_embed_small(labels, table):
    (b,) = labels.shape
    v, d = table.shape
    b_pad = _round_up(max(b, 8), 8)      # sublane-aligned output rows
    v_pad = _round_up(v, 128)            # clean 128-wide MXU contraction

    labels2d = labels.reshape(b, 1).astype(jnp.int32)
    if b_pad != b:
        labels2d = jnp.pad(labels2d, ((0, b_pad - b), (0, 0)))
    table_p = jnp.pad(table, ((0, v_pad - v), (0, 0))) if v_pad != v else table

    # Single invocation, no grid: full arrays land in VMEM once, one MXU pass,
    # one lane-dense [b_pad, d] store.  No per-step pipelining / sharding overhead.
    out = pl.pallas_call(
        _onehot_embed_kernel,
        out_shape=jax.ShapeDtypeStruct((b_pad, d), table.dtype),
    )(labels2d, table_p)
    return out[:b]


# ------------- scaling path: scalar-prefetch data-dependent gather -----------
def _row_gather_kernel(labels_ref, row_ref, out_ref):
    del labels_ref                        # only consumed by the index_maps
    out_ref[...] = row_ref[...]


def _label_embed_gather(labels, table):
    (b,) = labels.shape
    v, d = table.shape
    grid_spec = pltpu.PrefetchScalarGridSpec(
        num_scalar_prefetch=1,
        grid=(b,),
        in_specs=[
            # 1-row block => block index == row index: only row lbl[i] is DMA'd.
            pl.BlockSpec((1, d), lambda i, lbl: (lbl[i], 0)),
        ],
        out_specs=pl.BlockSpec((1, d), lambda i, lbl: (i, 0)),
    )
    return pl.pallas_call(
        _row_gather_kernel,
        out_shape=jax.ShapeDtypeStruct((b, d), table.dtype),
        grid_spec=grid_spec,
        compiler_params=pltpu.CompilerParams(
            dimension_semantics=("arbitrary",)),
    )(labels.astype(jnp.int32), table)


# --------------------------------- wrapper -----------------------------------
def label_embedder(labels, table):
    """Forward pass of LabelEmbedder: embedding_table[labels]."""
    v, d = table.shape
    padded_bytes = _round_up(v, 128) * d * jnp.dtype(table.dtype).itemsize
    if padded_bytes <= _SMALL_TABLE_BYTES:
        return _label_embed_small(labels, table)
    return _label_embed_gather(labels, table)


# ---------------------------- pure-JAX reference -----------------------------
def label_embedder_ref(labels, table):
    return jnp.take(table, labels, axis=0)


# ------------------------------------ main ------------------------------------
if __name__ == "__main__":
    key = jax.random.PRNGKey(0)
    k_tab, k_lab = jax.random.split(key, 2)

    # embedding table (num_classes + 1, cond_size), like nn.Embedding weights
    table = jax.random.normal(k_tab, (VOCAB, COND_SIZE), jnp.float32)

    # labels in [0, num_classes]; force class 0 and the CFG null class to appear
    labels = jax.random.randint(k_lab, (NUM_LABELS,), 0, VOCAB, dtype=jnp.int32)
    labels = labels.at[0].set(0).at[1].set(NUM_CLASSES)

    ref = jax.block_until_ready(label_embedder_ref(labels, table))

    # fast path (what the module's sizes actually use)
    out = jax.block_until_ready(label_embedder(labels, table))
    assert out.shape == (NUM_LABELS, COND_SIZE)
    assert bool(jnp.allclose(out, ref, rtol=0.0, atol=0.0)), (
        f"fast path max abs err {float(jnp.max(jnp.abs(out - ref)))}")

    # scaling path (scalar-prefetch row gather) — validated at small size too
    out_g = jax.block_until_ready(_label_embed_gather(labels, table))
    assert bool(jnp.allclose(out_g, ref, rtol=0.0, atol=0.0)), (
        f"gather path max abs err {float(jnp.max(jnp.abs(out_g - ref)))}")

    print("KERNEL_OK")
</pallas_src>

<mosaic_0001>
module attributes {stable_mosaic.version = 11 : i64} {
  func.func @_onehot_embed_kernel(%arg0: memref<16x1xi32, #tpu.memory_space<vmem>>, %arg1: memref<128x128xf32, #tpu.memory_space<vmem>>, %arg2: memref<16x128xf32, #tpu.memory_space<vmem>>) attributes {dimension_semantics = [], scalar_prefetch = 0 : i64, scratch_operands = 0 : i64, tpu.core_type = #tpu.core_type<tc>} {
    %c0 = arith.constant 0 : index
    %c0_0 = arith.constant 0 : index
    %0 = vector.load %arg0[%c0, %c0_0] : memref<16x1xi32, #tpu.memory_space<vmem>>, vector<16x1xi32>
    %1 = tpu.iota {dimensions = array<i32: 1>} : vector<16x128xi32>
    %2 = vector.broadcast %0 : vector<16x1xi32> to vector<16x128xi32>
    %3 = arith.cmpi eq, %1, %2 : vector<16x128xi32>
    %4 = arith.extui %3 : vector<16x128xi1> to vector<16x128xi32>
    %5 = arith.sitofp %4 : vector<16x128xi32> to vector<16x128xf32>
    %c0_1 = arith.constant 0 : index
    %c0_2 = arith.constant 0 : index
    %6 = vector.load %arg1[%c0_1, %c0_2] : memref<128x128xf32, #tpu.memory_space<vmem>>, vector<128x128xf32>
    %cst = arith.constant dense<0.000000e+00> : vector<16x128xf32>
    %7 = tpu.matmul %5, %6, %cst {dimension_numbers = #tpu.dot_dimension_numbers<[1], [0], [0], [1], [0, 0, 1, 1], [], []>} : vector<16x128xf32>, vector<128x128xf32>, vector<16x128xf32> -> vector<16x128xf32>
    %c0_3 = arith.constant 0 : index
    %c0_4 = arith.constant 0 : index
    %8 = vector.load %arg2[%c0_3, %c0_4] : memref<16x128xf32, #tpu.memory_space<vmem>>, vector<16x128xf32>
    tpu.vector_store %arg2[%c0_3, %c0_4], %7 {strides = array<i32>} : memref<16x128xf32, #tpu.memory_space<vmem>>, vector<16x128xf32>,
    return
  }
}

</mosaic_0001>

<llo_original>
// kernel: tpu_custom_call.1
$region0: #{tpu_custom_call.1}
  #allocation0 [shape = 'u32[]', space=smem, size = 0x4, offset = 0x4, fixed_abs, tag = 'smem constant byte address 0x4 - core index']
  #allocation1 [shape = 'u32[144,128]{1,0:T(1,128)}', space=vmem, size = 0x12000, scoped, tag = 'internal scratch']
  %s0 = inlined_call_operand.vmem [shape: s32[16,1], index: 0, kind: input, shape index: {}]
  %s1 = inlined_call_operand.hbm [shape: f32[128,128], index: 1, kind: input, shape index: {}]
  %s2 = inlined_call_operand.hbm [shape: f32[16,128], index: 2, kind: output, shape index: {}]
  %s3 = sld [smem:[#allocation0]]
  $region22: #{tpu_custom_call.1} parent=0
    _
  %s5 = ssub.s32 1, %s3
  %s6 = scalar_select 0, %s5, %s3
  $region1: #{tpu_custom_call.1} parent=0
    #allocation2 [shape = 'u8[65536]{0}', space=vmem, size = 0x10000, scoped, tag = 'input window, operand 1, single buffered']
    #allocation3 [shape = 's32[1]{0}', space=sflag, size = 0x4, scoped, tag = 'scoped memory for tpu_custom_call.1']
    #allocation4 [shape = 's32[1]{0}', space=sflag, size = 0x4, scoped, tag = 'scoped memory for tpu_custom_call.1']
    #allocation5 [shape = 'u8[8192]{0}', space=vmem, size = 0x2000, scoped, tag = 'output window, operand 0, single buffered']
    %7 = vsyncpa [#allocation3], 0
    %8 = vsyncpa [#allocation4], 0
    // Predicated region
    $region2: #{tpu_custom_call.1} parent=1 // pred_check
      _
    $region3: #{tpu_custom_call.1} parent=1 // pred_check_branch
      %10 = sbr.rel (0) target = $region5
    $region4: #{tpu_custom_call.1} parent=1 // pred_region
      _
    $region5: #{tpu_custom_call.1} parent=1 // pred_fallthru
      _
    // Predicated region
    $region6: #{tpu_custom_call.1} parent=1 // pred_check
      _
    $region7: #{tpu_custom_call.1} parent=1 // pred_check_branch
      %12 = sbr.rel (0) target = $region9
    $region8: #{tpu_custom_call.1} parent=1 // pred_region
      %s14 = ssub.s32 2048, 2048
      %15 = vsyncadd [#allocation3], %s14
      %s16 = sshll.u32 [#allocation2], 4
      %s17 = int_to_ptr.vmem [resolvable:$true] %s16
      %22 = dma.hbm_to_vmem [thread:$0]  %s1, 2048, %s17, [#allocation3], 128, 128, 8
    $region9: #{tpu_custom_call.1} parent=1 // pred_fallthru
      _
    // Predicated region
    $region10: #{tpu_custom_call.1} parent=1 // pred_check
      _
    $region11: #{tpu_custom_call.1} parent=1 // pred_check_branch
      %24 = sbr.rel (0) target = $region13
    $region12: #{tpu_custom_call.1} parent=1 // pred_region
      %25 = dma.done [#allocation3], 2048
    $region13: #{tpu_custom_call.1} parent=1 // pred_fallthru
      _
    %v26 = vld [vmem:[%s0] sm:$0xff]
    %v27 = vld [vmem:[%s0 + $0x8] sm:$0xff]
    %v28 = vlaneseq
    %v29 = vand.u32 %v28, 127
    %30 = vset.pattern.permute.xlu0 0
    %31 = vperm.xlu0 %30, %v26
    %v32 = vpop.permute.xlu0 %31
    %33 = vset.pattern.permute.xlu0 0
    %34 = vperm.xlu0 %33, %v27
    %v35 = vpop.permute.xlu0 %34
    %vm36 = vcmp.eq.s32.totalorder %v29, %v32
    %vm37 = vcmp.eq.s32.totalorder %v29, %v35
    %v38 = vsel %vm36, 1, 0
    %v39 = vsel %vm37, 1, 0
    %v40 = vcvt.s32.f32 %v38
    %v41 = vcvt.s32.f32 %v39
    %v42 = vld [vmem:[#allocation2] sm:$0xff]
    %v43 = vld [vmem:[#allocation2 + $0x8] sm:$0xff]
    %v44 = vld [vmem:[#allocation2 + $0x10] sm:$0xff]
    %v45 = vld [vmem:[#allocation2 + $0x18] sm:$0xff]
    %v46 = vld [vmem:[#allocation2 + $0x20] sm:$0xff]
    %v47 = vld [vmem:[#allocation2 + $0x28] sm:$0xff]
    %v48 = vld [vmem:[#allocation2 + $0x30] sm:$0xff]
    %v49 = vld [vmem:[#allocation2 + $0x38] sm:$0xff]
    %v50 = vld [vmem:[#allocation2 + $0x40] sm:$0xff]
    %v51 = vld [vmem:[#allocation2 + $0x48] sm:$0xff]
    %v52 = vld [vmem:[#allocation2 + $0x50] sm:$0xff]
    %v53 = vld [vmem:[#allocation2 + $0x58] sm:$0xff]
    %v54 = vld [vmem:[#allocation2 + $0x60] sm:$0xff]
    %v55 = vld [vmem:[#allocation2 + $0x68] sm:$0xff]
    %v56 = vld [vmem:[#allocation2 + $0x70] sm:$0xff]
    %v57 = vld [vmem:[#allocation2 + $0x78] sm:$0xff]
    %58 = vmatprep.subr.mxu0 0.0
    %59 = vmatpush1.msra.mxu0 %v42
    %60 = vmatprep.subr.mxu0 0.0
    %61 = vmatpush1.msra.mxu0 %v43
    %62 = vmatprep.subr.mxu0 0.0
    %63 = vmatpush1.msra.mxu0 %v44
    %64 = vmatprep.subr.mxu0 0.0
    %65 = vmatpush1.msra.mxu0 %v45
    %66 = vmatprep.subr.mxu0 0.0
    %67 = vmatpush1.msra.mxu0 %v46
    %68 = vmatprep.subr.mxu0 0.0
    %69 = vmatpush1.msra.mxu0 %v47
    %70 = vmatprep.subr.mxu0 0.0
    %71 = vmatpush1.msra.mxu0 %v48
    %72 = vmatprep.subr.mxu0 0.0
    %73 = vmatpush1.msra.mxu0 %v49
    %74 = vmatprep.subr.mxu0 0.0
    %75 = vmatpush1.msra.mxu0 %v50
    %76 = vmatprep.subr.mxu0 0.0
    %77 = vmatpush1.msra.mxu0 %v51
    %78 = vmatprep.subr.mxu0 0.0
    %79 = vmatpush1.msra.mxu0 %v52
    %80 = vmatprep.subr.mxu0 0.0
    %81 = vmatpush1.msra.mxu0 %v53
    %82 = vmatprep.subr.mxu0 0.0
    %83 = vmatpush1.msra.mxu0 %v54
    %84 = vmatprep.subr.mxu0 0.0
    %85 = vmatpush1.msra.mxu0 %v55
    %86 = vmatprep.subr.mxu0 0.0
    %87 = vmatpush1.msra.mxu0 %v56
    %88 = vmatprep.subr.mxu0 0.0
    %89 = vmatpush1.msra.mxu0 %v57
    %90 = vmatprep.subr.mxu0 0.0
    %91 = vmatpush1.msra.mxu0 0.0
    %92 = vmatprep.subr.mxu0 0.0
    %93 = vmatpush1.msra.mxu0 0.0
    %94 = vmatprep.subr.mxu0 0.0
    %95 = vmatpush1.msra.mxu0 0.0
    %96 = vmatprep.subr.mxu0 0.0
    %97 = vmatpush1.msra.mxu0 0.0
    %98 = vmatprep.subr.mxu0 0.0
    %99 = vmatpush1.msra.mxu0 0.0
    %100 = vmatprep.subr.mxu0 0.0
    %101 = vmatpush1.msra.mxu0 0.0
    %102 = vmatprep.subr.mxu0 0.0
    %103 = vmatpush1.msra.mxu0 0.0
    %104 = vmatprep.subr.mxu0 0.0
    %105 = vmatpush1.msra.mxu0 0.0
    %106 = vmatprep.subr.mxu0 0.0
    %107 = vmatpush1.msra.mxu0 0.0
    %108 = vmatprep.subr.mxu0 0.0
    %109 = vmatpush1.msra.mxu0 0.0
    %110 = vmatprep.subr.mxu0 0.0
    %111 = vmatpush1.msra.mxu0 0.0
    %112 = vmatprep.subr.mxu0 0.0
    %113 = vmatpush1.msra.mxu0 0.0
    %114 = vmatprep.subr.mxu0 0.0
    %115 = vmatpush1.msra.mxu0 0.0
    %116 = vmatprep.subr.mxu0 0.0
    %117 = vmatpush1.msra.mxu0 0.0
    %118 = vmatprep.subr.mxu0 0.0
    %119 = vmatpush1.msra.mxu0 0.0
    %120 = vmatprep.subr.mxu0 0.0
    %121 = vmatpush1.msra.mxu0 0.0
    %122 = vmatprep.mubr.f32.mxu0 0.0
    %123 = vmatmul.mubr.f32.gmra.mrb[0].mxu0 %v40
    %v124 = vpop.f32.mrb[0].mxu0
    %v125 = vadd.f32 0.0, %v124
    %v126 = vpop.f32.mrb[0].mxu0
    %127 = vmatprep.mubr.f32.mxu0 0.0
    %128 = vmatmul.mubr.f32.gmra.mrb[0].mxu0 %v41
    %v129 = vpop.f32.mrb[0].mxu0
    %v130 = vadd.f32 0.0, %v129
    %v131 = vpop.f32.mrb[0].mxu0
    %132 = vdwg.mxu0
    %133 = vst [vmem:[#allocation5] sm:$0xff] %v125
    %134 = vst [vmem:[#allocation5 + $0x8] sm:$0xff] %v130
    // Predicated region
    $region14: #{tpu_custom_call.1} parent=1 // pred_check
      _
    $region15: #{tpu_custom_call.1} parent=1 // pred_check_branch
      %136 = sbr.rel (0) target = $region17
    $region16: #{tpu_custom_call.1} parent=1 // pred_region
      %s138 = ssub.s32 256, 256
      %139 = vsyncadd [#allocation4], %s138
      %s140 = sshll.u32 [#allocation5], 4
      %s141 = int_to_ptr.vmem [resolvable:$true] %s140
      %146 = dma.vmem_to_hbm [thread:$0]  %s141, 256, %s2, [#allocation4], 128, 128, 8
    $region17: #{tpu_custom_call.1} parent=1 // pred_fallthru
      _
    // Predicated region
    $region18: #{tpu_custom_call.1} parent=1 // pred_check
      _
    $region19: #{tpu_custom_call.1} parent=1 // pred_check_branch
      %148 = sbr.rel (0) target = $region21
    $region20: #{tpu_custom_call.1} parent=1 // pred_region
      %149 = dma.done [#allocation4], 256
    $region21: #{tpu_custom_call.1} parent=1 // pred_fallthru
      _
    %150 = vsyncpa [#allocation3], 1
    %151 = vsyncpa [#allocation4], 1

</llo_original>
